<compile_context>
chip_gen: v7x
topology: tpu7x:2x2x1
jax: 0.10.0
libtpu: 0.0.40
codegen_flags: <defaults>
</compile_context>

<pallas_src>
import jax
import jax.numpy as jnp
from jax.experimental import pallas as pl
from jax.experimental.pallas import tpu as pltpu

_LANE = 128
_BLOCK_BUDGET = 2 * 1024 * 1024  # ~2 MiB for the dominant (x_noisy/out) block


def _add_mask_kernel(xn_ref, m_ref, xc_ref, o_ref):
    # xn_ref : (TB, C, TS, 128)  noisy image tile (lane-dense)
    # m_ref  : (TB, 1, TS, 128)  mask weights, native dtype (broadcast over C)
    # xc_ref : (TB, C, 1, 1)     per-(batch, channel) replacement value
    # o_ref  : (TB, C, TS, 128)
    xn = xn_ref[...]
    m = m_ref[...].astype(xn.dtype)          # in-kernel cast: free on a mem-bound op
    xc = xc_ref[...]
    # Lerp form of the blend: xn*(1-m) + xc*m == xn + (xc - xn)*m  (3 VALU ops).
    o_ref[...] = xn + (xc - xn) * m


def _choose_tiles(B, C, S, itemsize, budget=_BLOCK_BUDGET):
    """Pick (TB, TS): batch tile and 128-lane-row tile for the dominant block."""
    row_bytes = max(1, C * _LANE * itemsize)       # one (C, 1, 128) slice
    rows_fit = max(1, budget // row_bytes)
    if S >= 8 and rows_fit >= 8:
        TS = int(min((rows_fit // 8) * 8, (S // 8) * 8))   # multiple of 8 -> full (8,128) vregs
    else:
        TS = int(S)                                # full extent (always a legal block)
    blk_bytes = max(1, TS * row_bytes)
    TB = int(max(1, min(B, budget // blk_bytes)))
    return TB, TS


def add_mask_img_diff(x, mask, x_noisy, mask_token=None):
    """Pallas implementation of AddMaskImgDiff.forward.

    x, x_noisy : (B, C, h, w)
    mask       : (B, h, w) (anything with B*h*w elements), any dtype
    mask_token : unused in the output values (torch only uses it via type_as).
    Returns (x_mask, gt_mask) with x_mask shaped (B, C, h, w).
    """
    # TODO(synk): mask_token only influences dtypes via type_as in torch (its values
    # never reach the output); here the blend follows x_noisy.dtype.
    B, C, h, w = x.shape
    L = h * w
    mid = L // 2
    i_mid, j_mid = mid // w, mid % w
    dt = x_noisy.dtype
    itemsize = jnp.dtype(dt).itemsize

    # Mid token, channel-flipped — O(B*C) wrapper glue; the rest of x is never read.
    # torch: x_change = flip(x.flatten(2).transpose(1,2)[:, L//2, :], dims=[-1])
    x_change = x[:, ::-1, i_mid, j_mid].astype(dt)

    flops = 3 * B * C * L
    bytes_accessed = (2 * B * C * L * itemsize                     # read x_noisy + write out
                      + B * L * jnp.dtype(mask.dtype).itemsize     # read mask (native dtype)
                      + B * C * itemsize)                          # read x_change

    if L % _LANE == 0:
        # (8,128)-friendly layout: channels in a leading dim, full 128-lane last dim.
        S = L // _LANE
        TB, TS = _choose_tiles(B, C, S, itemsize)
        xn4 = x_noisy.reshape(B, C, S, _LANE)      # free metadata reshape (contiguous)
        m4 = mask.reshape(B, 1, S, _LANE)          # native dtype, no wrapper cast
        xc4 = x_change.reshape(B, C, 1, 1)
        grid = (pl.cdiv(B, TB), pl.cdiv(S, TS))
        out = pl.pallas_call(
            _add_mask_kernel,
            out_shape=jax.ShapeDtypeStruct((B, C, S, _LANE), dt),
            grid=grid,
            in_specs=[
                pl.BlockSpec((TB, C, TS, _LANE), lambda b, s: (b, 0, s, 0)),
                pl.BlockSpec((TB, 1, TS, _LANE), lambda b, s: (b, 0, s, 0)),
                pl.BlockSpec((TB, C, 1, 1), lambda b, s: (b, 0, 0, 0)),
            ],
            out_specs=pl.BlockSpec((TB, C, TS, _LANE), lambda b, s: (b, 0, s, 0)),
            compiler_params=pltpu.CompilerParams(
                dimension_semantics=("parallel", "parallel")),
            cost_estimate=pl.CostEstimate(
                flops=flops, transcendentals=0, bytes_accessed=bytes_accessed),
        )(xn4, m4, xc4)
        x_mask = out.reshape(B, C, h, w)
    else:
        # Fallback for L not a multiple of 128: flat spatial dim, whole image per
        # batch-tile.  Masked partial-lane stores + per-block VMEM that scales with
        # the image — a perf cliff, not a correctness issue.
        TB = int(max(1, min(B, _BLOCK_BUDGET // max(1, C * L * itemsize))))
        xn3 = x_noisy.reshape(B, C, L)
        m3 = mask.reshape(B, 1, L)
        xc3 = x_change.reshape(B, C, 1)
        out = pl.pallas_call(
            _add_mask_kernel,
            out_shape=jax.ShapeDtypeStruct((B, C, L), dt),
            grid=(pl.cdiv(B, TB),),
            in_specs=[
                pl.BlockSpec((TB, C, L), lambda b: (b, 0, 0)),
                pl.BlockSpec((TB, 1, L), lambda b: (b, 0, 0)),
                pl.BlockSpec((TB, C, 1), lambda b: (b, 0, 0)),
            ],
            out_specs=pl.BlockSpec((TB, C, L), lambda b: (b, 0, 0)),
            compiler_params=pltpu.CompilerParams(
                dimension_semantics=("parallel",)),
            cost_estimate=pl.CostEstimate(
                flops=flops, transcendentals=0, bytes_accessed=bytes_accessed),
        )(xn3, m3, xc3)
        x_mask = out.reshape(B, C, h, w)

    gt_mask = mask                                  # identity pass-through
    return x_mask, gt_mask


def add_mask_reference(x, mask, x_noisy):
    """Pure-JAX reference mirroring the torch module exactly."""
    B, C, h, w = x.shape
    L = h * w
    xf = x.reshape(B, C, L).transpose(0, 2, 1)            # (B, L, C)
    xnf = x_noisy.reshape(B, C, L).transpose(0, 2, 1)     # (B, L, C)
    mweight = mask.reshape(B, L).astype(x_noisy.dtype)[:, :, None]
    x_change = xf[:, L // 2, :][:, ::-1][:, None, :]      # (B, 1, C), channel-flipped
    x_mask = xnf * (1.0 - mweight) + x_change * mweight
    x_mask = x_mask.transpose(0, 2, 1).reshape(B, C, h, w)
    return x_mask, mask


if __name__ == "__main__":
    key = jax.random.PRNGKey(0)
    kx, kn, km = jax.random.split(key, 3)
    B, C, h, w = 2, 4, 16, 16
    x = jax.random.normal(kx, (B, C, h, w), dtype=jnp.float32)
    x_noisy = jax.random.normal(kn, (B, C, h, w), dtype=jnp.float32)
    mask = (jax.random.uniform(km, (B, h, w)) > 0.5).astype(jnp.float32)

    x_mask, gt_mask = add_mask_img_diff(x, mask, x_noisy)
    x_mask = jax.block_until_ready(x_mask)

    ref_mask, ref_gt = add_mask_reference(x, mask, x_noisy)
    assert x_mask.shape == ref_mask.shape, (x_mask.shape, ref_mask.shape)
    assert bool(jnp.allclose(x_mask, ref_mask, atol=1e-6, rtol=1e-6)), "x_mask mismatch"
    assert bool(jnp.array_equal(gt_mask, ref_gt)), "gt_mask mismatch"

    print("KERNEL_OK")
</pallas_src>

<mosaic_0001>
module attributes {stable_mosaic.version = 11 : i64} {
  func.func @_add_mask_kernel(%arg0: i32, %arg1: i32, %arg2: memref<2x4x2x128xf32, #tpu.memory_space<vmem>>, %arg3: memref<2x1x2x128xf32, #tpu.memory_space<vmem>>, %arg4: memref<2x4x1x1xf32, #tpu.memory_space<vmem>>, %arg5: memref<2x4x2x128xf32, #tpu.memory_space<vmem>>) attributes {dimension_semantics = [#tpu.dimension_semantics<parallel>, #tpu.dimension_semantics<parallel>], iteration_bounds = array<i64: 1, 1>, scalar_prefetch = 0 : i64, scratch_operands = 0 : i64, tpu.core_type = #tpu.core_type<tc>, window_params = [{transform_indices = @transform_0, window_bounds = array<i64: 2, 4, 2, 128>}, {transform_indices = @transform_1, window_bounds = array<i64: 2, 1, 2, 128>}, {transform_indices = @transform_2, window_bounds = array<i64: 2, 4, 1, 1>}, {transform_indices = @transform_3, window_bounds = array<i64: 2, 4, 2, 128>}]} {
    %c0 = arith.constant 0 : index
    %c0_0 = arith.constant 0 : index
    %c0_1 = arith.constant 0 : index
    %c0_2 = arith.constant 0 : index
    %0 = vector.load %arg2[%c0, %c0_0, %c0_1, %c0_2] : memref<2x4x2x128xf32, #tpu.memory_space<vmem>>, vector<2x4x2x128xf32>
    %c0_3 = arith.constant 0 : index
    %c0_4 = arith.constant 0 : index
    %c0_5 = arith.constant 0 : index
    %c0_6 = arith.constant 0 : index
    %1 = vector.load %arg3[%c0_3, %c0_4, %c0_5, %c0_6] : memref<2x1x2x128xf32, #tpu.memory_space<vmem>>, vector<2x1x2x128xf32>
    %c0_7 = arith.constant 0 : index
    %c0_8 = arith.constant 0 : index
    %c0_9 = arith.constant 0 : index
    %c0_10 = arith.constant 0 : index
    %2 = vector.load %arg4[%c0_7, %c0_8, %c0_9, %c0_10] : memref<2x4x1x1xf32, #tpu.memory_space<vmem>>, vector<2x4x1x1xf32>
    %3 = vector.broadcast %2 : vector<2x4x1x1xf32> to vector<2x4x2x128xf32>
    %4 = arith.subf %3, %0 : vector<2x4x2x128xf32>
    %5 = vector.broadcast %1 : vector<2x1x2x128xf32> to vector<2x4x2x128xf32>
    %6 = arith.mulf %4, %5 : vector<2x4x2x128xf32>
    %7 = arith.addf %0, %6 : vector<2x4x2x128xf32>
    %c0_11 = arith.constant 0 : index
    %c0_12 = arith.constant 0 : index
    %c0_13 = arith.constant 0 : index
    %c0_14 = arith.constant 0 : index
    %8 = vector.load %arg5[%c0_11, %c0_12, %c0_13, %c0_14] : memref<2x4x2x128xf32, #tpu.memory_space<vmem>>, vector<2x4x2x128xf32>
    tpu.vector_store %arg5[%c0_11, %c0_12, %c0_13, %c0_14], %7 {strides = array<i32>} : memref<2x4x2x128xf32, #tpu.memory_space<vmem>>, vector<2x4x2x128xf32>,
    return
  }
  func.func @transform_0(%arg0: i32, %arg1: i32) -> (i32, i32, i32, i32) {
    %c0_i32 = arith.constant 0 : i32
    %c0_i32_0 = arith.constant 0 : i32
    %c0_i32_1 = arith.constant 0 : i32
    return %arg0, %c0_i32, %arg1, %c0_i32_0 : i32, i32, i32, i32
  }
  func.func @transform_1(%arg0: i32, %arg1: i32) -> (i32, i32, i32, i32) {
    %c0_i32 = arith.constant 0 : i32
    %c0_i32_0 = arith.constant 0 : i32
    %c0_i32_1 = arith.constant 0 : i32
    return %arg0, %c0_i32, %arg1, %c0_i32_0 : i32, i32, i32, i32
  }
  func.func @transform_2(%arg0: i32, %arg1: i32) -> (i32, i32, i32, i32) {
    %c0_i32 = arith.constant 0 : i32
    %c0_i32_0 = arith.constant 0 : i32
    %c0_i32_1 = arith.constant 0 : i32
    %c0_i32_2 = arith.constant 0 : i32
    return %arg0, %c0_i32, %c0_i32_0, %c0_i32_1 : i32, i32, i32, i32
  }
  func.func @transform_3(%arg0: i32, %arg1: i32) -> (i32, i32, i32, i32) {
    %c0_i32 = arith.constant 0 : i32
    %c0_i32_0 = arith.constant 0 : i32
    %c0_i32_1 = arith.constant 0 : i32
    return %arg0, %c0_i32, %arg1, %c0_i32_0 : i32, i32, i32, i32
  }
}

</mosaic_0001>

<llo_original>
// kernel: tpu_custom_call.1
$region0: #{tpu_custom_call.1}
  #allocation0 [shape = 'u32[]', space=smem, size = 0x4, offset = 0x4, fixed_abs, tag = 'smem constant byte address 0x4 - core index']
  #allocation1 [shape = 'u32[144,128]{1,0:T(1,128)}', space=vmem, size = 0x12000, scoped, tag = 'internal scratch']
  %s0 = inlined_call_operand.hbm [shape: f32[2,4,2,128], index: 0, kind: input, shape index: {}]
  %s1 = inlined_call_operand.vmem [shape: f32[2,1,2,128], index: 1, kind: input, shape index: {}]
  %s2 = inlined_call_operand.vmem [shape: f32[2,4,1,1], index: 2, kind: input, shape index: {}]
  %s3 = inlined_call_operand.hbm [shape: f32[2,4,2,128], index: 3, kind: output, shape index: {}]
  %s4 = sld [smem:[#allocation0]]
  $region26: #{tpu_custom_call.1} parent=0
    _
  %s6 = ssub.s32 1, %s4
  %s7 = scalar_select 0, %s6, %s4
  $region1: #{tpu_custom_call.1} parent=0
    #allocation2 [shape = 'u8[8192]{0}', space=vmem, size = 0x2000, scoped, tag = 'input window, operand 0, single buffered']
    #allocation3 [shape = 's32[1]{0}', space=sflag, size = 0x4, scoped, tag = 'scoped memory for tpu_custom_call.1']
    #allocation4 [shape = 's32[1]{0}', space=sflag, size = 0x4, scoped, tag = 'scoped memory for tpu_custom_call.1']
    #allocation5 [shape = 'u8[8192]{0}', space=vmem, size = 0x2000, scoped, tag = 'output window, operand 0, single buffered']
    %8 = vsyncpa [#allocation3], 0
    %9 = vsyncpa [#allocation4], 0
    // Predicated region
    $region2: #{tpu_custom_call.1} parent=1 // pred_check
      _
    $region3: #{tpu_custom_call.1} parent=1 // pred_check_branch
      %11 = sbr.rel (0) target = $region5
    $region4: #{tpu_custom_call.1} parent=1 // pred_region
      %s13 = ssub.s32 256, 256
      %14 = vsyncadd [#allocation3], %s13
      %s15 = sshll.u32 [#allocation2], 4
      %s16 = int_to_ptr.vmem [resolvable:$true] %s15
      %21 = dma.hbm_to_vmem [thread:$0]  %s0, 256, %s16, [#allocation3], 32, 32, 2
    $region5: #{tpu_custom_call.1} parent=1 // pred_fallthru
      _
    // Predicated region
    $region6: #{tpu_custom_call.1} parent=1 // pred_check
      _
    $region7: #{tpu_custom_call.1} parent=1 // pred_check_branch
      %23 = sbr.rel (0) target = $region9
    $region8: #{tpu_custom_call.1} parent=1 // pred_region
      _
    $region9: #{tpu_custom_call.1} parent=1 // pred_fallthru
      _
    // Predicated region
    $region10: #{tpu_custom_call.1} parent=1 // pred_check
      _
    $region11: #{tpu_custom_call.1} parent=1 // pred_check_branch
      %25 = sbr.rel (0) target = $region13
    $region12: #{tpu_custom_call.1} parent=1 // pred_region
      _
    $region13: #{tpu_custom_call.1} parent=1 // pred_fallthru
      _
    // Predicated region
    $region14: #{tpu_custom_call.1} parent=1 // pred_check
      _
    $region15: #{tpu_custom_call.1} parent=1 // pred_check_branch
      %27 = sbr.rel (0) target = $region17
    $region16: #{tpu_custom_call.1} parent=1 // pred_region
      %28 = dma.done [#allocation3], 256
    $region17: #{tpu_custom_call.1} parent=1 // pred_fallthru
      _
    %v29 = vld [vmem:[#allocation2] sm:$0x3]
    %v30 = vld [vmem:[#allocation2 + $0x2] sm:$0x3]
    %v31 = vld [vmem:[#allocation2 + $0x4] sm:$0x3]
    %v32 = vld [vmem:[#allocation2 + $0x6] sm:$0x3]
    %v33 = vld [vmem:[#allocation2 + $0x8] sm:$0x3]
    %v34 = vld [vmem:[#allocation2 + $0xa] sm:$0x3]
    %v35 = vld [vmem:[#allocation2 + $0xc] sm:$0x3]
    %v36 = vld [vmem:[#allocation2 + $0xe] sm:$0x3]
    %v37 = vld [vmem:[%s1] sm:$0x3]
    %v38 = vld [vmem:[%s1 + $0x2] sm:$0x3]
    %v39 = vld [vmem:[%s2] sm:$0x1]
    %v40 = vld [vmem:[%s2 + $0x1] sm:$0x1]
    %v41 = vld [vmem:[%s2 + $0x2] sm:$0x1]
    %v42 = vld [vmem:[%s2 + $0x3] sm:$0x1]
    %v43 = vld [vmem:[%s2 + $0x4] sm:$0x1]
    %v44 = vld [vmem:[%s2 + $0x5] sm:$0x1]
    %v45 = vld [vmem:[%s2 + $0x6] sm:$0x1]
    %v46 = vld [vmem:[%s2 + $0x7] sm:$0x1]
    %v55 = vlaneseq
    %v56 = vshrl.u32 %v55, 7
    %v57 = vsub.s32 0, %v56
    %v58 = vrot.slane %v39, %v57
    %v59 = vlaneseq
    %v60 = vshrl.u32 %v59, 7
    %v61 = vsub.s32 0, %v60
    %v62 = vrot.slane %v40, %v61
    %v63 = vlaneseq
    %v64 = vshrl.u32 %v63, 7
    %v65 = vsub.s32 0, %v64
    %v66 = vrot.slane %v41, %v65
    %v67 = vlaneseq
    %v68 = vshrl.u32 %v67, 7
    %v69 = vsub.s32 0, %v68
    %v70 = vrot.slane %v42, %v69
    %v71 = vlaneseq
    %v72 = vshrl.u32 %v71, 7
    %v73 = vsub.s32 0, %v72
    %v74 = vrot.slane %v43, %v73
    %v75 = vlaneseq
    %v76 = vshrl.u32 %v75, 7
    %v77 = vsub.s32 0, %v76
    %v78 = vrot.slane %v44, %v77
    %v79 = vlaneseq
    %v80 = vshrl.u32 %v79, 7
    %v81 = vsub.s32 0, %v80
    %v82 = vrot.slane %v45, %v81
    %v83 = vlaneseq
    %v84 = vshrl.u32 %v83, 7
    %v85 = vsub.s32 0, %v84
    %v86 = vrot.slane %v46, %v85
    %87 = vset.pattern.permute.xlu0 0
    %88 = vperm.xlu0 %87, %v58
    %v89 = vpop.permute.xlu0 %88
    %91 = vset.pattern.permute.xlu0 0
    %92 = vperm.xlu0 %91, %v62
    %v93 = vpop.permute.xlu0 %92
    %95 = vset.pattern.permute.xlu0 0
    %96 = vperm.xlu0 %95, %v66
    %v97 = vpop.permute.xlu0 %96
    %99 = vset.pattern.permute.xlu0 0
    %100 = vperm.xlu0 %99, %v70
    %v101 = vpop.permute.xlu0 %100
    %103 = vset.pattern.permute.xlu0 0
    %104 = vperm.xlu0 %103, %v74
    %v105 = vpop.permute.xlu0 %104
    %107 = vset.pattern.permute.xlu0 0
    %108 = vperm.xlu0 %107, %v78
    %v109 = vpop.permute.xlu0 %108
    %111 = vset.pattern.permute.xlu0 0
    %112 = vperm.xlu0 %111, %v82
    %v113 = vpop.permute.xlu0 %112
    %115 = vset.pattern.permute.xlu0 0
    %116 = vperm.xlu0 %115, %v86
    %v117 = vpop.permute.xlu0 %116
    %v119 = vsub.f32 %v89, %v29
    %v120 = vsub.f32 %v93, %v30
    %v121 = vsub.f32 %v97, %v31
    %v122 = vsub.f32 %v101, %v32
    %v123 = vsub.f32 %v105, %v33
    %v124 = vsub.f32 %v109, %v34
    %v125 = vsub.f32 %v113, %v35
    %v126 = vsub.f32 %v117, %v36
    %v127 = vmul.f32 %v119, %v37
    %v128 = vmul.f32 %v120, %v37
    %v129 = vmul.f32 %v121, %v37
    %v130 = vmul.f32 %v122, %v37
    %v131 = vmul.f32 %v123, %v38
    %v132 = vmul.f32 %v124, %v38
    %v133 = vmul.f32 %v125, %v38
    %v134 = vmul.f32 %v126, %v38
    %v135 = vadd.f32 %v29, %v127
    %v136 = vadd.f32 %v30, %v128
    %v137 = vadd.f32 %v31, %v129
    %v138 = vadd.f32 %v32, %v130
    %v139 = vadd.f32 %v33, %v131
    %v140 = vadd.f32 %v34, %v132
    %v141 = vadd.f32 %v35, %v133
    %v142 = vadd.f32 %v36, %v134
    %143 = vst [vmem:[#allocation5] sm:$0x3] %v135
    %144 = vst [vmem:[#allocation5 + $0x2] sm:$0x3] %v136
    %145 = vst [vmem:[#allocation5 + $0x4] sm:$0x3] %v137
    %146 = vst [vmem:[#allocation5 + $0x6] sm:$0x3] %v138
    %147 = vst [vmem:[#allocation5 + $0x8] sm:$0x3] %v139
    %148 = vst [vmem:[#allocation5 + $0xa] sm:$0x3] %v140
    %149 = vst [vmem:[#allocation5 + $0xc] sm:$0x3] %v141
    %150 = vst [vmem:[#allocation5 + $0xe] sm:$0x3] %v142
    // Predicated region
    $region18: #{tpu_custom_call.1} parent=1 // pred_check
      _
    $region19: #{tpu_custom_call.1} parent=1 // pred_check_branch
      %152 = sbr.rel (0) target = $region21
    $region20: #{tpu_custom_call.1} parent=1 // pred_region
      %s154 = ssub.s32 256, 256
      %155 = vsyncadd [#allocation4], %s154
      %s156 = sshll.u32 [#allocation5], 4
      %s157 = int_to_ptr.vmem [resolvable:$true] %s156
      %162 = dma.vmem_to_hbm [thread:$0]  %s157, 256, %s3, [#allocation4], 32, 32, 2
    $region21: #{tpu_custom_call.1} parent=1 // pred_fallthru
      _
    // Predicated region
    $region22: #{tpu_custom_call.1} parent=1 // pred_check
      _
    $region23: #{tpu_custom_call.1} parent=1 // pred_check_branch
      %164 = sbr.rel (0) target = $region25
    $region24: #{tpu_custom_call.1} parent=1 // pred_region
      %165 = dma.done [#allocation4], 256
    $region25: #{tpu_custom_call.1} parent=1 // pred_fallthru
      _
    %166 = vsyncpa [#allocation3], 1
    %167 = vsyncpa [#allocation4], 1

</llo_original>
